<compile_context>
chip_gen: v7x
topology: tpu7x:2x2x1
jax: 0.10.0
libtpu: 0.0.40
codegen_flags: <defaults>
</compile_context>

<pallas_src>
import jax
import jax.numpy as jnp
from jax.experimental import pallas as pl
from jax.experimental.pallas import tpu as pltpu


def _bbox_encoder_kernel(x_ref, w1_ref, b1_ref, w2_ref, b2_ref, o_ref, h_ref):
    # x_ref:  [TILE_N, 4]
    # w1_ref: [4, H/2]      b1_ref: [1, H/2]
    # w2_ref: [H/2, TILE_H] b2_ref: [1, TILE_H]
    # o_ref:  [TILE_N, TILE_H]
    # h_ref:  [TILE_N, H/2] VMEM scratch (layer-1 activation, reused across j)

    @pl.when(pl.program_id(1) == 0)
    def _():
        h = jnp.dot(x_ref[...], w1_ref[...], preferred_element_type=jnp.float32)
        h = jnp.maximum(h + b1_ref[...].astype(jnp.float32), 0.0)
        h_ref[...] = h.astype(h_ref.dtype)

    out = jnp.dot(h_ref[...], w2_ref[...], preferred_element_type=jnp.float32)
    out = out + b2_ref[...].astype(jnp.float32)
    o_ref[...] = out.astype(o_ref.dtype)


def bbox_encoder(x, w1, b1, w2, b2, *, tile_n=None, tile_h=None):
    """Fused MLP: relu(x @ w1 + b1) @ w2 + b2.

    x:  [..., 4]
    w1: [4, H/2], b1: [H/2]
    w2: [H/2, H], b2: [H]
    returns [..., H]
    """
    assert x.shape[-1] == 4, "bbox input must have 4 features"
    h_half, hidden = w2.shape
    assert w1.shape == (4, h_half) and b1.shape == (h_half,) and b2.shape == (hidden,)
    assert 2 * h_half == hidden, "hidden_size must be even"

    lead_shape = x.shape[:-1]
    n = 1
    for d in lead_shape:
        n *= int(d)
    n = max(n, 1)

    out_dtype = x.dtype
    x2d = x.reshape(n, 4)
    b1r = b1.reshape(1, h_half)
    b2r = b2.reshape(1, hidden)

    w_bytes = jnp.dtype(w2.dtype).itemsize
    o_bytes = jnp.dtype(out_dtype).itemsize

    # Row (N) tile: multiple of 128, big enough to amortize per-step overhead,
    # small enough that the layer-1 activation scratch stays modest.
    if tile_n is None:
        cap = (4 * 1024 * 1024) // max(h_half * 4, 1)
        cap = max(128, min(1024, (cap // 128) * 128))
        tile_n = min(cap, pl.cdiv(n, 128) * 128)
    assert tile_n % 128 == 0

    # Hidden (output-column) tile: full H if the double-buffered (w2 slab + out
    # tile) stream fits a ~20 MiB budget (w2 then stays resident across all row
    # tiles); otherwise the largest 128-multiple divisor of H that fits.
    if tile_h is None:
        if hidden % 128 != 0:
            tile_h = hidden
        else:
            per_col = 2 * (h_half * w_bytes + tile_n * o_bytes + w_bytes)
            budget = 20 * 1024 * 1024
            max_cols = max(128, (budget // per_col) // 128 * 128)
            if max_cols >= hidden:
                tile_h = hidden
            else:
                tile_h = 128
                d = 256
                while d <= max_cols:
                    if hidden % d == 0:
                        tile_h = d
                    d += 128
    assert hidden % tile_h == 0

    n_pad = pl.cdiv(n, tile_n) * tile_n
    if n_pad != n:
        x2d = jnp.pad(x2d, ((0, n_pad - n), (0, 0)))  # padded rows sliced off below

    grid = (n_pad // tile_n, hidden // tile_h)

    out = pl.pallas_call(
        _bbox_encoder_kernel,
        out_shape=jax.ShapeDtypeStruct((n_pad, hidden), out_dtype),
        grid=grid,
        in_specs=[
            pl.BlockSpec((tile_n, 4), lambda i, j: (i, 0)),       # streamed row tile
            pl.BlockSpec((4, h_half), lambda i, j: (0, 0)),       # resident weights
            pl.BlockSpec((1, h_half), lambda i, j: (0, 0)),
            pl.BlockSpec((h_half, tile_h), lambda i, j: (0, j)),  # w2 column slab
            pl.BlockSpec((1, tile_h), lambda i, j: (0, j)),
        ],
        out_specs=pl.BlockSpec((tile_n, tile_h), lambda i, j: (i, j)),
        scratch_shapes=[pltpu.VMEM((tile_n, h_half), w2.dtype)],
        compiler_params=pltpu.CompilerParams(
            dimension_semantics=("parallel", "arbitrary"),  # v7x: shard rows over TCs
            vmem_limit_bytes=32 * 1024 * 1024,
        ),
    )(x2d, w1, b1r, w2, b2r)

    if n_pad != n:
        out = out[:n]
    return out.reshape(*lead_shape, hidden)


def init_bbox_encoder_params(key, hidden_size, dtype=jnp.float32):
    """Deterministic init mimicking PyTorch nn.Linear (uniform +/- 1/sqrt(fan_in))."""
    h_half = hidden_size // 2
    k1, k2, k3, k4 = jax.random.split(key, 4)
    bound1 = 1.0 / jnp.sqrt(4.0)
    bound2 = 1.0 / jnp.sqrt(float(h_half))
    # Stored as [in_features, out_features] (transposed from PyTorch layout).
    w1 = jax.random.uniform(k1, (4, h_half), dtype, -bound1, bound1)
    b1 = jax.random.uniform(k2, (h_half,), dtype, -bound1, bound1)
    w2 = jax.random.uniform(k3, (h_half, hidden_size), dtype, -bound2, bound2)
    b2 = jax.random.uniform(k4, (hidden_size,), dtype, -bound2, bound2)
    return w1, b1, w2, b2


if __name__ == "__main__":
    key = jax.random.PRNGKey(0)
    k_x, k_p = jax.random.split(key)

    batch, seq, hidden = 2, 8, 32
    # bounding boxes: [..., 4]
    x = jax.random.uniform(k_x, (batch, seq, 4), jnp.float32)

    w1, b1, w2, b2 = init_bbox_encoder_params(k_p, hidden)

    out = bbox_encoder(x, w1, b1, w2, b2)
    out = jax.block_until_ready(out)

    # Reference check in plain JAX.
    ref = jnp.maximum(x.reshape(-1, 4) @ w1 + b1, 0.0) @ w2 + b2
    ref = ref.reshape(batch, seq, hidden)
    assert out.shape == (batch, seq, hidden)
    assert jnp.allclose(out, ref, atol=1e-5, rtol=1e-5), "mismatch vs reference"

    print("KERNEL_OK")
</pallas_src>

<mosaic_0001>
module attributes {stable_mosaic.version = 11 : i64} {
  func.func @_bbox_encoder_kernel(%arg0: i32, %arg1: i32, %arg2: memref<128x4xf32, #tpu.memory_space<vmem>>, %arg3: memref<4x16xf32, #tpu.memory_space<vmem>>, %arg4: memref<1x16xf32, #tpu.memory_space<vmem>>, %arg5: memref<16x32xf32, #tpu.memory_space<vmem>>, %arg6: memref<1x32xf32, #tpu.memory_space<vmem>>, %arg7: memref<128x32xf32, #tpu.memory_space<vmem>>, %arg8: memref<128x16xf32, #tpu.memory_space<vmem>>) attributes {dimension_semantics = [#tpu.dimension_semantics<parallel>, #tpu.dimension_semantics<arbitrary>], iteration_bounds = array<i64: 1, 1>, scalar_prefetch = 0 : i64, scratch_operands = 1 : i64, tpu.core_type = #tpu.core_type<tc>, window_params = [{transform_indices = @transform_0, window_bounds = array<i64: 128, 4>}, {pipeline_mode = #tpu.pipeline_mode<synchronous>, transform_indices = @transform_1, window_bounds = array<i64: 4, 16>}, {pipeline_mode = #tpu.pipeline_mode<synchronous>, transform_indices = @transform_2, window_bounds = array<i64: 1, 16>}, {transform_indices = @transform_3, window_bounds = array<i64: 16, 32>}, {transform_indices = @transform_4, window_bounds = array<i64: 1, 32>}, {transform_indices = @transform_5, window_bounds = array<i64: 128, 32>}]} {
    %c0_i32 = arith.constant 0 : i32
    %0 = arith.cmpi eq, %arg1, %c0_i32 : i32
    %1 = arith.extui %0 : i1 to i32
    %c0_i32_0 = arith.constant 0 : i32
    %2 = arith.cmpi ne, %1, %c0_i32_0 : i32
    scf.if %2 {
      %c0_8 = arith.constant 0 : index
      %c0_9 = arith.constant 0 : index
      %10 = vector.load %arg2[%c0_8, %c0_9] : memref<128x4xf32, #tpu.memory_space<vmem>>, vector<128x4xf32>
      %c0_10 = arith.constant 0 : index
      %c0_11 = arith.constant 0 : index
      %11 = vector.load %arg3[%c0_10, %c0_11] : memref<4x16xf32, #tpu.memory_space<vmem>>, vector<4x16xf32>
      %cst_12 = arith.constant dense<0.000000e+00> : vector<128x16xf32>
      %12 = tpu.matmul %10, %11, %cst_12 {dimension_numbers = #tpu.dot_dimension_numbers<[1], [0], [0], [1], [0, 0, 1, 1], [], []>} : vector<128x4xf32>, vector<4x16xf32>, vector<128x16xf32> -> vector<128x16xf32>
      %c0_13 = arith.constant 0 : index
      %c0_14 = arith.constant 0 : index
      %13 = vector.load %arg4[%c0_13, %c0_14] : memref<1x16xf32, #tpu.memory_space<vmem>>, vector<1x16xf32>
      %14 = vector.broadcast %13 : vector<1x16xf32> to vector<128x16xf32>
      %15 = arith.addf %12, %14 : vector<128x16xf32>
      %cst_15 = arith.constant 0.000000e+00 : f32
      %16 = vector.broadcast %cst_15 : f32 to vector<128x16xf32>
      %17 = arith.maximumf %15, %16 : vector<128x16xf32>
      %c0_16 = arith.constant 0 : index
      %c0_17 = arith.constant 0 : index
      %18 = vector.load %arg8[%c0_16, %c0_17] : memref<128x16xf32, #tpu.memory_space<vmem>>, vector<128x16xf32>
      tpu.vector_store %arg8[%c0_16, %c0_17], %17 {strides = array<i32>} : memref<128x16xf32, #tpu.memory_space<vmem>>, vector<128x16xf32>,
    } else {
    }
    %c0 = arith.constant 0 : index
    %c0_1 = arith.constant 0 : index
    %3 = vector.load %arg8[%c0, %c0_1] : memref<128x16xf32, #tpu.memory_space<vmem>>, vector<128x16xf32>
    %c0_2 = arith.constant 0 : index
    %c0_3 = arith.constant 0 : index
    %4 = vector.load %arg5[%c0_2, %c0_3] : memref<16x32xf32, #tpu.memory_space<vmem>>, vector<16x32xf32>
    %cst = arith.constant dense<0.000000e+00> : vector<128x32xf32>
    %5 = tpu.matmul %3, %4, %cst {dimension_numbers = #tpu.dot_dimension_numbers<[1], [0], [0], [1], [0, 0, 1, 1], [], []>} : vector<128x16xf32>, vector<16x32xf32>, vector<128x32xf32> -> vector<128x32xf32>
    %c0_4 = arith.constant 0 : index
    %c0_5 = arith.constant 0 : index
    %6 = vector.load %arg6[%c0_4, %c0_5] : memref<1x32xf32, #tpu.memory_space<vmem>>, vector<1x32xf32>
    %7 = vector.broadcast %6 : vector<1x32xf32> to vector<128x32xf32>
    %8 = arith.addf %5, %7 : vector<128x32xf32>
    %c0_6 = arith.constant 0 : index
    %c0_7 = arith.constant 0 : index
    %9 = vector.load %arg7[%c0_6, %c0_7] : memref<128x32xf32, #tpu.memory_space<vmem>>, vector<128x32xf32>
    tpu.vector_store %arg7[%c0_6, %c0_7], %8 {strides = array<i32>} : memref<128x32xf32, #tpu.memory_space<vmem>>, vector<128x32xf32>,
    return
  }
  func.func @transform_0(%arg0: i32, %arg1: i32) -> (i32, i32) {
    %c0_i32 = arith.constant 0 : i32
    %c0_i32_0 = arith.constant 0 : i32
    return %arg0, %c0_i32 : i32, i32
  }
  func.func @transform_1(%arg0: i32, %arg1: i32) -> (i32, i32) {
    %c0_i32 = arith.constant 0 : i32
    %c0_i32_0 = arith.constant 0 : i32
    %c0_i32_1 = arith.constant 0 : i32
    return %c0_i32, %c0_i32_0 : i32, i32
  }
  func.func @transform_2(%arg0: i32, %arg1: i32) -> (i32, i32) {
    %c0_i32 = arith.constant 0 : i32
    %c0_i32_0 = arith.constant 0 : i32
    %c0_i32_1 = arith.constant 0 : i32
    return %c0_i32, %c0_i32_0 : i32, i32
  }
  func.func @transform_3(%arg0: i32, %arg1: i32) -> (i32, i32) {
    %c0_i32 = arith.constant 0 : i32
    %c0_i32_0 = arith.constant 0 : i32
    return %c0_i32, %arg1 : i32, i32
  }
  func.func @transform_4(%arg0: i32, %arg1: i32) -> (i32, i32) {
    %c0_i32 = arith.constant 0 : i32
    %c0_i32_0 = arith.constant 0 : i32
    return %c0_i32, %arg1 : i32, i32
  }
  func.func @transform_5(%arg0: i32, %arg1: i32) -> (i32, i32) {
    %c0_i32 = arith.constant 0 : i32
    return %arg0, %arg1 : i32, i32
  }
}

</mosaic_0001>

<llo_original>
// kernel: tpu_custom_call.1
$region0: #{tpu_custom_call.1}
  #allocation0 [shape = 'u32[]', space=smem, size = 0x4, offset = 0x4, fixed_abs, tag = 'smem constant byte address 0x4 - core index']
  #allocation1 [shape = 'u32[144,128]{1,0:T(1,128)}', space=vmem, size = 0x12000, scoped, tag = 'internal scratch']
  #allocation2 [shape = 'f32[128,16]{1,0:T(8,128)}', space=vmem, size = 0x10000, scoped, tag = 'scratch operand']
  %s0 = inlined_call_operand.vmem [shape: f32[128,4], index: 0, kind: input, shape index: {}]
  %s1 = inlined_call_operand.vmem [shape: f32[4,16], index: 1, kind: input, shape index: {}]
  %s2 = inlined_call_operand.vmem [shape: f32[1,16], index: 2, kind: input, shape index: {}]
  %s3 = inlined_call_operand.vmem [shape: f32[16,32], index: 3, kind: input, shape index: {}]
  %s4 = inlined_call_operand.vmem [shape: f32[1,32], index: 4, kind: input, shape index: {}]
  %s5 = inlined_call_operand.vmem [shape: f32[128,32], index: 5, kind: output, shape index: {}]
  %s6 = sld [smem:[#allocation0]]
  $region34: #{tpu_custom_call.1} parent=0
    _
  %s8 = ssub.s32 1, %s6
  %s9 = scalar_select 0, %s8, %s6
  // Predicated region
  $region2: #{tpu_custom_call.1} parent=0 // pred_check
    _
  $region3: #{tpu_custom_call.1} parent=0 // pred_check_branch
    %11 = sbr.rel (0) target = $region5
  $region4: #{tpu_custom_call.1} parent=0 // pred_region
    _
  $region5: #{tpu_custom_call.1} parent=0 // pred_fallthru
    _
  // Predicated region
  $region6: #{tpu_custom_call.1} parent=0 // pred_check
    _
  $region7: #{tpu_custom_call.1} parent=0 // pred_check_branch
    %13 = sbr.rel (0) target = $region9
  $region8: #{tpu_custom_call.1} parent=0 // pred_region
    _
  $region9: #{tpu_custom_call.1} parent=0 // pred_fallthru
    _
  // Predicated region
  $region10: #{tpu_custom_call.1} parent=0 // pred_check
    _
  $region11: #{tpu_custom_call.1} parent=0 // pred_check_branch
    %15 = sbr.rel (0) target = $region13
  $region12: #{tpu_custom_call.1} parent=0 // pred_region
    _
  $region13: #{tpu_custom_call.1} parent=0 // pred_fallthru
    _
  // Predicated region
  $region14: #{tpu_custom_call.1} parent=0 // pred_check
    _
  $region15: #{tpu_custom_call.1} parent=0 // pred_check_branch
    %17 = sbr.rel (0) target = $region17
  $region16: #{tpu_custom_call.1} parent=0 // pred_region
    _
  $region17: #{tpu_custom_call.1} parent=0 // pred_fallthru
    _
  // Predicated region
  $region18: #{tpu_custom_call.1} parent=0 // pred_check
    _
  $region19: #{tpu_custom_call.1} parent=0 // pred_check_branch
    %19 = sbr.rel (0) target = $region21
  $region20: #{tpu_custom_call.1} parent=0 // pred_region
    _
  $region21: #{tpu_custom_call.1} parent=0 // pred_fallthru
    _
  %p20 = scmp.eq.s32.totalorder 0, 0
  // Predicated region
  $region22: #{tpu_custom_call.1} parent=0 // pred_check
    %p21 = pneg %p20
  $region23: #{tpu_custom_call.1} parent=0 // pred_check_branch
    %23 = sbr.rel (%p21) target = $region25
  $region24: #{tpu_custom_call.1} parent=0 // pred_region
    %v24 = vld [vmem:[%s0] sm:$0xff]
    %v25 = vld [vmem:[%s0 + $0x8] sm:$0xff]
    %v26 = vld [vmem:[%s0 + $0x10] sm:$0xff]
    %v27 = vld [vmem:[%s0 + $0x18] sm:$0xff]
    %v28 = vld [vmem:[%s0 + $0x20] sm:$0xff]
    %v29 = vld [vmem:[%s0 + $0x28] sm:$0xff]
    %v30 = vld [vmem:[%s0 + $0x30] sm:$0xff]
    %v31 = vld [vmem:[%s0 + $0x38] sm:$0xff]
    %v32 = vld [vmem:[%s0 + $0x40] sm:$0xff]
    %v33 = vld [vmem:[%s0 + $0x48] sm:$0xff]
    %v34 = vld [vmem:[%s0 + $0x50] sm:$0xff]
    %v35 = vld [vmem:[%s0 + $0x58] sm:$0xff]
    %v36 = vld [vmem:[%s0 + $0x60] sm:$0xff]
    %v37 = vld [vmem:[%s0 + $0x68] sm:$0xff]
    %v38 = vld [vmem:[%s0 + $0x70] sm:$0xff]
    %v39 = vld [vmem:[%s0 + $0x78] sm:$0xff]
    %v40 = vld [vmem:[%s1] sm:$0xf]
    %v41 = vld [vmem:[%s2] sm:$0x1]
    %v43 = vlaneseq
    %v44 = vshrl.u32 %v43, 7
    %v45 = vsub.s32 0, %v44
    %v46 = vrot.slane %v41, %v45
    %vm48 = vcmask 31744
    %v50 = vsel %vm48, %v24, 0
    %v53 = vsel %vm48, %v25, 0
    %v56 = vsel %vm48, %v26, 0
    %v59 = vsel %vm48, %v27, 0
    %v62 = vsel %vm48, %v28, 0
    %v65 = vsel %vm48, %v29, 0
    %v68 = vsel %vm48, %v30, 0
    %v71 = vsel %vm48, %v31, 0
    %v74 = vsel %vm48, %v32, 0
    %v77 = vsel %vm48, %v33, 0
    %v80 = vsel %vm48, %v34, 0
    %v83 = vsel %vm48, %v35, 0
    %v86 = vsel %vm48, %v36, 0
    %v89 = vsel %vm48, %v37, 0
    %v92 = vsel %vm48, %v38, 0
    %v95 = vsel %vm48, %v39, 0
    %vm97 = vcmask 1043456
    %v99 = vsel %vm97, %v40, 0
    %101 = vmatprep.subr.mxu0 0.0
    %102 = vmatpush1.msra.mxu0 %v99
    %103 = vmatprep.subr.mxu0 0.0
    %104 = vmatpush1.msra.mxu0 0.0
    %105 = vmatprep.subr.mxu0 0.0
    %106 = vmatpush1.msra.mxu0 0.0
    %107 = vmatprep.subr.mxu0 0.0
    %108 = vmatpush1.msra.mxu0 0.0
    %109 = vmatprep.subr.mxu0 0.0
    %110 = vmatpush1.msra.mxu0 0.0
    %111 = vmatprep.subr.mxu0 0.0
    %112 = vmatpush1.msra.mxu0 0.0
    %113 = vmatprep.subr.mxu0 0.0
    %114 = vmatpush1.msra.mxu0 0.0
    %115 = vmatprep.subr.mxu0 0.0
    %116 = vmatpush1.msra.mxu0 0.0
    %117 = vmatprep.subr.mxu0 0.0
    %118 = vmatpush1.msra.mxu0 0.0
    %119 = vmatprep.subr.mxu0 0.0
    %120 = vmatpush1.msra.mxu0 0.0
    %121 = vmatprep.subr.mxu0 0.0
    %122 = vmatpush1.msra.mxu0 0.0
    %123 = vmatprep.subr.mxu0 0.0
    %124 = vmatpush1.msra.mxu0 0.0
    %125 = vmatprep.subr.mxu0 0.0
    %126 = vmatpush1.msra.mxu0 0.0
    %127 = vmatprep.subr.mxu0 0.0
    %128 = vmatpush1.msra.mxu0 0.0
    %129 = vmatprep.subr.mxu0 0.0
    %130 = vmatpush1.msra.mxu0 0.0
    %131 = vmatprep.subr.mxu0 0.0
    %132 = vmatpush1.msra.mxu0 0.0
    %133 = vmatprep.subr.mxu0 0.0
    %134 = vmatpush1.msra.mxu0 0.0
    %135 = vmatprep.subr.mxu0 0.0
    %136 = vmatpush1.msra.mxu0 0.0
    %137 = vmatprep.subr.mxu0 0.0
    %138 = vmatpush1.msra.mxu0 0.0
    %139 = vmatprep.subr.mxu0 0.0
    %140 = vmatpush1.msra.mxu0 0.0
    %141 = vmatprep.subr.mxu0 0.0
    %142 = vmatpush1.msra.mxu0 0.0
    %143 = vmatprep.subr.mxu0 0.0
    %144 = vmatpush1.msra.mxu0 0.0
    %145 = vmatprep.subr.mxu0 0.0
    %146 = vmatpush1.msra.mxu0 0.0
    %147 = vmatprep.subr.mxu0 0.0
    %148 = vmatpush1.msra.mxu0 0.0
    %149 = vmatprep.subr.mxu0 0.0
    %150 = vmatpush1.msra.mxu0 0.0
    %151 = vmatprep.subr.mxu0 0.0
    %152 = vmatpush1.msra.mxu0 0.0
    %153 = vmatprep.subr.mxu0 0.0
    %154 = vmatpush1.msra.mxu0 0.0
    %155 = vmatprep.subr.mxu0 0.0
    %156 = vmatpush1.msra.mxu0 0.0
    %157 = vmatprep.subr.mxu0 0.0
    %158 = vmatpush1.msra.mxu0 0.0
    %159 = vmatprep.subr.mxu0 0.0
    %160 = vmatpush1.msra.mxu0 0.0
    %161 = vmatprep.subr.mxu0 0.0
    %162 = vmatpush1.msra.mxu0 0.0
    %163 = vmatprep.subr.mxu0 0.0
    %164 = vmatpush1.msra.mxu0 0.0
    %165 = vmatprep.mubr.f32.mxu0 0.0
    %166 = vmatmul.mubr.f32.gmra.mrb[0].mxu0 %v50
    %v167 = vpop.f32.mrb[0].mxu0
    %v168 = vadd.f32 %v46, %v167
    %v169 = vpop.f32.mrb[0].mxu0
    %170 = vmatprep.mubr.f32.mxu0 0.0
    %171 = vmatmul.mubr.f32.gmra.mrb[0].mxu0 %v53
    %v172 = vpop.f32.mrb[0].mxu0
    %v173 = vadd.f32 %v46, %v172
    %v174 = vpop.f32.mrb[0].mxu0
    %175 = vmatprep.mubr.f32.mxu0 0.0
    %176 = vmatmul.mubr.f32.gmra.mrb[0].mxu0 %v56
    %v177 = vpop.f32.mrb[0].mxu0
    %v178 = vadd.f32 %v46, %v177
    %v179 = vpop.f32.mrb[0].mxu0
    %180 = vmatprep.mubr.f32.mxu0 0.0
    %181 = vmatmul.mubr.f32.gmra.mrb[0].mxu0 %v59
    %v182 = vpop.f32.mrb[0].mxu0
    %v183 = vadd.f32 %v46, %v182
    %v184 = vpop.f32.mrb[0].mxu0
    %185 = vmatprep.mubr.f32.mxu0 0.0
    %186 = vmatmul.mubr.f32.gmra.mrb[0].mxu0 %v62
    %v187 = vpop.f32.mrb[0].mxu0
    %v188 = vadd.f32 %v46, %v187
    %v189 = vpop.f32.mrb[0].mxu0
    %190 = vmatprep.mubr.f32.mxu0 0.0
    %191 = vmatmul.mubr.f32.gmra.mrb[0].mxu0 %v65
    %v192 = vpop.f32.mrb[0].mxu0
    %v193 = vadd.f32 %v46, %v192
    %v194 = vpop.f32.mrb[0].mxu0
    %195 = vmatprep.mubr.f32.mxu0 0.0
    %196 = vmatmul.mubr.f32.gmra.mrb[0].mxu0 %v68
    %v197 = vpop.f32.mrb[0].mxu0
    %v198 = vadd.f32 %v46, %v197
    %v199 = vpop.f32.mrb[0].mxu0
    %200 = vmatprep.mubr.f32.mxu0 0.0
    %201 = vmatmul.mubr.f32.gmra.mrb[0].mxu0 %v71
    %v202 = vpop.f32.mrb[0].mxu0
    %v203 = vadd.f32 %v46, %v202
    %v204 = vpop.f32.mrb[0].mxu0
    %205 = vmatprep.mubr.f32.mxu0 0.0
    %206 = vmatmul.mubr.f32.gmra.mrb[0].mxu0 %v74
    %v207 = vpop.f32.mrb[0].mxu0
    %v208 = vadd.f32 %v46, %v207
    %v209 = vpop.f32.mrb[0].mxu0
    %210 = vmatprep.mubr.f32.mxu0 0.0
    %211 = vmatmul.mubr.f32.gmra.mrb[0].mxu0 %v77
    %v212 = vpop.f32.mrb[0].mxu0
    %v213 = vadd.f32 %v46, %v212
    %v214 = vpop.f32.mrb[0].mxu0
    %215 = vmatprep.mubr.f32.mxu0 0.0
    %216 = vmatmul.mubr.f32.gmra.mrb[0].mxu0 %v80
    %v217 = vpop.f32.mrb[0].mxu0
    %v218 = vadd.f32 %v46, %v217
    %v219 = vpop.f32.mrb[0].mxu0
    %220 = vmatprep.mubr.f32.mxu0 0.0
    %221 = vmatmul.mubr.f32.gmra.mrb[0].mxu0 %v83
    %v222 = vpop.f32.mrb[0].mxu0
    %v223 = vadd.f32 %v46, %v222
    %v224 = vpop.f32.mrb[0].mxu0
    %225 = vmatprep.mubr.f32.mxu0 0.0
    %226 = vmatmul.mubr.f32.gmra.mrb[0].mxu0 %v86
    %v227 = vpop.f32.mrb[0].mxu0
    %v228 = vadd.f32 %v46, %v227
    %v229 = vpop.f32.mrb[0].mxu0
    %230 = vmatprep.mubr.f32.mxu0 0.0
    %231 = vmatmul.mubr.f32.gmra.mrb[0].mxu0 %v89
    %v232 = vpop.f32.mrb[0].mxu0
    %v233 = vadd.f32 %v46, %v232
    %v234 = vpop.f32.mrb[0].mxu0
    %235 = vmatprep.mubr.f32.mxu0 0.0
    %236 = vmatmul.mubr.f32.gmra.mrb[0].mxu0 %v92
    %v237 = vpop.f32.mrb[0].mxu0
    %v238 = vadd.f32 %v46, %v237
    %v239 = vpop.f32.mrb[0].mxu0
    %240 = vmatprep.mubr.f32.mxu0 0.0
    %241 = vmatmul.mubr.f32.gmra.mrb[0].mxu0 %v95
    %v242 = vpop.f32.mrb[0].mxu0
    %v243 = vadd.f32 %v46, %v242
    %v244 = vpop.f32.mrb[0].mxu0
    %245 = vdwg.mxu0
    %v246 = vmax.f32 %v168, 0.0
    %v247 = vmax.f32 %v173, 0.0
    %v248 = vmax.f32 %v178, 0.0
    %v249 = vmax.f32 %v183, 0.0
    %v250 = vmax.f32 %v188, 0.0
    %v251 = vmax.f32 %v193, 0.0
    %v252 = vmax.f32 %v198, 0.0
    %v253 = vmax.f32 %v203, 0.0
    %v254 = vmax.f32 %v208, 0.0
    %v255 = vmax.f32 %v213, 0.0
    %v256 = vmax.f32 %v218, 0.0
    %v257 = vmax.f32 %v223, 0.0
    %v258 = vmax.f32 %v228, 0.0
    %v259 = vmax.f32 %v233, 0.0
    %v260 = vmax.f32 %v238, 0.0
    %v261 = vmax.f32 %v243, 0.0
    %vm262 = vcmask 130048
    %263 = vst.msk [vmem:[#allocation2] sm:$0xff] %vm262, %v246
    %264 = vst.msk [vmem:[#allocation2 + $0x8] sm:$0xff] %vm262, %v247
    %265 = vst.msk [vmem:[#allocation2 + $0x10] sm:$0xff] %vm262, %v248
    %266 = vst.msk [vmem:[#allocation2 + $0x18] sm:$0xff] %vm262, %v249
    %267 = vst.msk [vmem:[#allocation2 + $0x20] sm:$0xff] %vm262, %v250
    %268 = vst.msk [vmem:[#allocation2 + $0x28] sm:$0xff] %vm262, %v251
    %269 = vst.msk [vmem:[#allocation2 + $0x30] sm:$0xff] %vm262, %v252
    %270 = vst.msk [vmem:[#allocation2 + $0x38] sm:$0xff] %vm262, %v253
    %271 = vst.msk [vmem:[#allocation2 + $0x40] sm:$0xff] %vm262, %v254
    %272 = vst.msk [vmem:[#allocation2 + $0x48] sm:$0xff] %vm262, %v255
    %273 = vst.msk [vmem:[#allocation2 + $0x50] sm:$0xff] %vm262, %v256
    %274 = vst.msk [vmem:[#allocation2 + $0x58] sm:$0xff] %vm262, %v257
    %275 = vst.msk [vmem:[#allocation2 + $0x60] sm:$0xff] %vm262, %v258
    %276 = vst.msk [vmem:[#allocation2 + $0x68] sm:$0xff] %vm262, %v259
    %277 = vst.msk [vmem:[#allocation2 + $0x70] sm:$0xff] %vm262, %v260
    %278 = vst.msk [vmem:[#allocation2 + $0x78] sm:$0xff] %vm262, %v261
  $region25: #{tpu_custom_call.1} parent=0 // pred_fallthru
    _
  %v279 = vld [vmem:[#allocation2] sm:$0xff]
  %v280 = vld [vmem:[#allocation2 + $0x8] sm:$0xff]
  %v281 = vld [vmem:[#allocation2 + $0x10] sm:$0xff]
  %v282 = vld [vmem:[#allocation2 + $0x18] sm:$0xff]
  %v283 = vld [vmem:[#allocation2 + $0x20] sm:$0xff]
  %v284 = vld [vmem:[#allocation2 + $0x28] sm:$0xff]
  %v285 = vld [vmem:[#allocation2 + $0x30] sm:$0xff]
  %v286 = vld [vmem:[#allocation2 + $0x38] sm:$0xff]
  %v287 = vld [vmem:[#allocation2 + $0x40] sm:$0xff]
  %v288 = vld [vmem:[#allocation2 + $0x48] sm:$0xff]
  %v289 = vld [vmem:[#allocation2 + $0x50] sm:$0xff]
  %v290 = vld [vmem:[#allocation2 + $0x58] sm:$0xff]
  %v291 = vld [vmem:[#allocation2 + $0x60] sm:$0xff]
  %v292 = vld [vmem:[#allocation2 + $0x68] sm:$0xff]
  %v293 = vld [vmem:[#allocation2 + $0x70] sm:$0xff]
  %v294 = vld [vmem:[#allocation2 + $0x78] sm:$0xff]
  %v295 = vld [vmem:[%s3] sm:$0xff]
  %v296 = vld [vmem:[%s3 + $0x8] sm:$0xff]
  %v297 = vld [vmem:[%s4] sm:$0x1]
  %v299 = vlaneseq
  %v300 = vshrl.u32 %v299, 7
  %v301 = vsub.s32 0, %v300
  %v302 = vrot.slane %v297, %v301
  %vm304 = vcmask 130048
  %v306 = vsel %vm304, %v279, 0
  %v309 = vsel %vm304, %v280, 0
  %v312 = vsel %vm304, %v281, 0
  %v315 = vsel %vm304, %v282, 0
  %v318 = vsel %vm304, %v283, 0
  %v321 = vsel %vm304, %v284, 0
  %v324 = vsel %vm304, %v285, 0
  %v327 = vsel %vm304, %v286, 0
  %v330 = vsel %vm304, %v287, 0
  %v333 = vsel %vm304, %v288, 0
  %v336 = vsel %vm304, %v289, 0
  %v339 = vsel %vm304, %v290, 0
  %v342 = vsel %vm304, %v291, 0
  %v345 = vsel %vm304, %v292, 0
  %v348 = vsel %vm304, %v293, 0
  %v351 = vsel %vm304, %v294, 0
  %353 = vmatprep.subr.mxu0 0.0
  %354 = vmatpush1.msra.mxu0 %v295
  %355 = vmatprep.subr.mxu0 0.0
  %356 = vmatpush1.msra.mxu0 %v296
  %357 = vmatprep.subr.mxu0 0.0
  %358 = vmatpush1.msra.mxu0 0.0
  %359 = vmatprep.subr.mxu0 0.0
  %360 = vmatpush1.msra.mxu0 0.0
  %361 = vmatprep.subr.mxu0 0.0
  %362 = vmatpush1.msra.mxu0 0.0
  %363 = vmatprep.subr.mxu0 0.0
  %364 = vmatpush1.msra.mxu0 0.0
  %365 = vmatprep.subr.mxu0 0.0
  %366 = vmatpush1.msra.mxu0 0.0
  %367 = vmatprep.subr.mxu0 0.0
  %368 = vmatpush1.msra.mxu0 0.0
  %369 = vmatprep.subr.mxu0 0.0
  %370 = vmatpush1.msra.mxu0 0.0
  %371 = vmatprep.subr.mxu0 0.0
  %372 = vmatpush1.msra.mxu0 0.0
  %373 = vmatprep.subr.mxu0 0.0
  %374 = vmatpush1.msra.mxu0 0.0
  %375 = vmatprep.subr.mxu0 0.0
  %376 = vmatpush1.msra.mxu0 0.0
  %377 = vmatprep.subr.mxu0 0.0
  %378 = vmatpush1.msra.mxu0 0.0
  %379 = vmatprep.subr.mxu0 0.0
  %380 = vmatpush1.msra.mxu0 0.0
  %381 = vmatprep.subr.mxu0 0.0
  %382 = vmatpush1.msra.mxu0 0.0
  %383 = vmatprep.subr.mxu0 0.0
  %384 = vmatpush1.msra.mxu0 0.0
  %385 = vmatprep.subr.mxu0 0.0
  %386 = vmatpush1.msra.mxu0 0.0
  %387 = vmatprep.subr.mxu0 0.0
  %388 = vmatpush1.msra.mxu0 0.0
  %389 = vmatprep.subr.mxu0 0.0
  %390 = vmatpush1.msra.mxu0 0.0
  %391 = vmatprep.subr.mxu0 0.0
  %392 = vmatpush1.msra.mxu0 0.0
  %393 = vmatprep.subr.mxu0 0.0
  %394 = vmatpush1.msra.mxu0 0.0
  %395 = vmatprep.subr.mxu0 0.0
  %396 = vmatpush1.msra.mxu0 0.0
  %397 = vmatprep.subr.mxu0 0.0
  %398 = vmatpush1.msra.mxu0 0.0
  %399 = vmatprep.subr.mxu0 0.0
  %400 = vmatpush1.msra.mxu0 0.0
  %401 = vmatprep.subr.mxu0 0.0
  %402 = vmatpush1.msra.mxu0 0.0
  %403 = vmatprep.subr.mxu0 0.0
  %404 = vmatpush1.msra.mxu0 0.0
  %405 = vmatprep.subr.mxu0 0.0
  %406 = vmatpush1.msra.mxu0 0.0
  %407 = vmatprep.subr.mxu0 0.0
  %408 = vmatpush1.msra.mxu0 0.0
  %409 = vmatprep.subr.mxu0 0.0
  %410 = vmatpush1.msra.mxu0 0.0
  %411 = vmatprep.subr.mxu0 0.0
  %412 = vmatpush1.msra.mxu0 0.0
  %413 = vmatprep.subr.mxu0 0.0
  %414 = vmatpush1.msra.mxu0 0.0
  %415 = vmatprep.subr.mxu0 0.0
  %416 = vmatpush1.msra.mxu0 0.0
  %417 = vmatprep.mubr.f32.mxu0 0.0
  %418 = vmatmul.mubr.f32.gmra.mrb[0].mxu0 %v306
  %v419 = vpop.f32.mrb[0].mxu0
  %v420 = vadd.f32 %v302, %v419
  %v421 = vpop.f32.mrb[0].mxu0
  %422 = vmatprep.mubr.f32.mxu0 0.0
  %423 = vmatmul.mubr.f32.gmra.mrb[0].mxu0 %v309
  %v424 = vpop.f32.mrb[0].mxu0
  %v425 = vadd.f32 %v302, %v424
  %v426 = vpop.f32.mrb[0].mxu0
  %427 = vmatprep.mubr.f32.mxu0 0.0
  %428 = vmatmul.mubr.f32.gmra.mrb[0].mxu0 %v312
  %v429 = vpop.f32.mrb[0].mxu0
  %v430 = vadd.f32 %v302, %v429
  %v431 = vpop.f32.mrb[0].mxu0
  %432 = vmatprep.mubr.f32.mxu0 0.0
  %433 = vmatmul.mubr.f32.gmra.mrb[0].mxu0 %v315
  %v434 = vpop.f32.mrb[0].mxu0
  %v435 = vadd.f32 %v302, %v434
  %v436 = vpop.f32.mrb[0].mxu0
  %437 = vmatprep.mubr.f32.mxu0 0.0
  %438 = vmatmul.mubr.f32.gmra.mrb[0].mxu0 %v318
  %v439 = vpop.f32.mrb[0].mxu0
  %v440 = vadd.f32 %v302, %v439
  %v441 = vpop.f32.mrb[0].mxu0
  %442 = vmatprep.mubr.f32.mxu0 0.0
  %443 = vmatmul.mubr.f32.gmra.mrb[0].mxu0 %v321
  %v444 = vpop.f32.mrb[0].mxu0
  %v445 = vadd.f32 %v302, %v444
  %v446 = vpop.f32.mrb[0].mxu0
  %447 = vmatprep.mubr.f32.mxu0 0.0
  %448 = vmatmul.mubr.f32.gmra.mrb[0].mxu0 %v324
  %v449 = vpop.f32.mrb[0].mxu0
  %v450 = vadd.f32 %v302, %v449
  %v451 = vpop.f32.mrb[0].mxu0
  %452 = vmatprep.mubr.f32.mxu0 0.0
  %453 = vmatmul.mubr.f32.gmra.mrb[0].mxu0 %v327
  %v454 = vpop.f32.mrb[0].mxu0
  %v455 = vadd.f32 %v302, %v454
  %v456 = vpop.f32.mrb[0].mxu0
  %457 = vmatprep.mubr.f32.mxu0 0.0
  %458 = vmatmul.mubr.f32.gmra.mrb[0].mxu0 %v330
  %v459 = vpop.f32.mrb[0].mxu0
  %v460 = vadd.f32 %v302, %v459
  %v461 = vpop.f32.mrb[0].mxu0
  %462 = vmatprep.mubr.f32.mxu0 0.0
  %463 = vmatmul.mubr.f32.gmra.mrb[0].mxu0 %v333
  %v464 = vpop.f32.mrb[0].mxu0
  %v465 = vadd.f32 %v302, %v464
  %v466 = vpop.f32.mrb[0].mxu0
  %467 = vmatprep.mubr.f32.mxu0 0.0
  %468 = vmatmul.mubr.f32.gmra.mrb[0].mxu0 %v336
  %v469 = vpop.f32.mrb[0].mxu0
  %v470 = vadd.f32 %v302, %v469
  %v471 = vpop.f32.mrb[0].mxu0
  %472 = vmatprep.mubr.f32.mxu0 0.0
  %473 = vmatmul.mubr.f32.gmra.mrb[0].mxu0 %v339
  %v474 = vpop.f32.mrb[0].mxu0
  %v475 = vadd.f32 %v302, %v474
  %v476 = vpop.f32.mrb[0].mxu0
  %477 = vmatprep.mubr.f32.mxu0 0.0
  %478 = vmatmul.mubr.f32.gmra.mrb[0].mxu0 %v342
  %v479 = vpop.f32.mrb[0].mxu0
  %v480 = vadd.f32 %v302, %v479
  %v481 = vpop.f32.mrb[0].mxu0
  %482 = vmatprep.mubr.f32.mxu0 0.0
  %483 = vmatmul.mubr.f32.gmra.mrb[0].mxu0 %v345
  %v484 = vpop.f32.mrb[0].mxu0
  %v485 = vadd.f32 %v302, %v484
  %v486 = vpop.f32.mrb[0].mxu0
  %487 = vmatprep.mubr.f32.mxu0 0.0
  %488 = vmatmul.mubr.f32.gmra.mrb[0].mxu0 %v348
  %v489 = vpop.f32.mrb[0].mxu0
  %v490 = vadd.f32 %v302, %v489
  %v491 = vpop.f32.mrb[0].mxu0
  %492 = vmatprep.mubr.f32.mxu0 0.0
  %493 = vmatmul.mubr.f32.gmra.mrb[0].mxu0 %v351
  %v494 = vpop.f32.mrb[0].mxu0
  %v495 = vadd.f32 %v302, %v494
  %v496 = vpop.f32.mrb[0].mxu0
  %497 = vdwg.mxu0
  %vm498 = vcmask 261120
  %499 = vst.msk [vmem:[%s5] sm:$0xff] %vm498, %v420
  %500 = vst.msk [vmem:[%s5 + $0x8] sm:$0xff] %vm498, %v425
  %501 = vst.msk [vmem:[%s5 + $0x10] sm:$0xff] %vm498, %v430
  %502 = vst.msk [vmem:[%s5 + $0x18] sm:$0xff] %vm498, %v435
  %503 = vst.msk [vmem:[%s5 + $0x20] sm:$0xff] %vm498, %v440
  %504 = vst.msk [vmem:[%s5 + $0x28] sm:$0xff] %vm498, %v445
  %505 = vst.msk [vmem:[%s5 + $0x30] sm:$0xff] %vm498, %v450
  %506 = vst.msk [vmem:[%s5 + $0x38] sm:$0xff] %vm498, %v455
  %507 = vst.msk [vmem:[%s5 + $0x40] sm:$0xff] %vm498, %v460
  %508 = vst.msk [vmem:[%s5 + $0x48] sm:$0xff] %vm498, %v465
  %509 = vst.msk [vmem:[%s5 + $0x50] sm:$0xff] %vm498, %v470
  %510 = vst.msk [vmem:[%s5 + $0x58] sm:$0xff] %vm498, %v475
  %511 = vst.msk [vmem:[%s5 + $0x60] sm:$0xff] %vm498, %v480
  %512 = vst.msk [vmem:[%s5 + $0x68] sm:$0xff] %vm498, %v485
  %513 = vst.msk [vmem:[%s5 + $0x70] sm:$0xff] %vm498, %v490
  %514 = vst.msk [vmem:[%s5 + $0x78] sm:$0xff] %vm498, %v495
  // Predicated region
  $region26: #{tpu_custom_call.1} parent=0 // pred_check
    _
  $region27: #{tpu_custom_call.1} parent=0 // pred_check_branch
    %516 = sbr.rel (0) target = $region29
  $region28: #{tpu_custom_call.1} parent=0 // pred_region
    _
  $region29: #{tpu_custom_call.1} parent=0 // pred_fallthru
    _
  // Predicated region
  $region30: #{tpu_custom_call.1} parent=0 // pred_check
    _
  $region31: #{tpu_custom_call.1} parent=0 // pred_check_branch
    %518 = sbr.rel (0) target = $region33
  $region32: #{tpu_custom_call.1} parent=0 // pred_region
    _
  $region33: #{tpu_custom_call.1} parent=0 // pred_fallthru
    _

</llo_original>
